<compile_context>
chip_gen: v6e
topology: v6e:2x2x1
jax: 0.10.0
libtpu: 0.0.40
codegen_flags: <defaults>
</compile_context>

<pallas_src>
import functools

import jax
import jax.numpy as jnp
from jax.experimental import pallas as pl
from jax.experimental.pallas import tpu as pltpu

LANE = 128


def _round_up(x: int, m: int) -> int:
    return ((x + m - 1) // m) * m


# --------------------------------------------------------------------------- kernels


def _fc_single_kernel(x_ref, w_ref, b_ref, o_ref, *, softplus: bool):
    """n_layers == 0 path: embedding fused into readout -> one matmul (+ softplus).

    x_ref: (TB, Kp) bf16   w_ref: (Kp, Op) bf16   b_ref: (1, Op) f32   o_ref: (TB, Op)
    """
    y = jnp.dot(x_ref[...], w_ref[...], preferred_element_type=jnp.float32) + b_ref[...]
    if softplus:
        # torch.nn.Softplus(beta=1, threshold=20)
        y = jnp.where(y > 20.0, y, jnp.log1p(jnp.exp(jnp.minimum(y, 20.0))))
    o_ref[...] = y.astype(o_ref.dtype)


def _fc_core_kernel(x_ref, w0_ref, b0_ref, *rest, n_rest: int, softplus: bool,
                    compute_dtype):
    """n_layers >= 1 path.

    x_ref : (TB, Kp) bf16 (lane-dense, pre-cast)
    w0_ref: (Kp, Hp) bf16, b0_ref: (1, Hp) f32  -- embedding fused into core layer 0
    rest  : [wc_ref (n_rest, Hp, Hp) bf16, bc_ref (n_rest, 1, Hp) f32]   (iff n_rest > 0)
            wr_ref (Hp, Op) bf16, br_ref (1, Op) f32, o_ref (TB, Op)
    """
    if n_rest > 0:
        wc_ref, bc_ref, wr_ref, br_ref, o_ref = rest
    else:
        wr_ref, br_ref, o_ref = rest

    # fused embedding + core layer 0 (bf16 MXU operands, f32 accumulation) + ReLU
    y = jnp.dot(x_ref[...], w0_ref[...], preferred_element_type=jnp.float32) + b0_ref[...]
    y = jnp.maximum(y, 0.0).astype(compute_dtype)   # ReLU commutes with the bf16 cast

    # remaining core layers (static unroll; n_rest is a trace-time constant)
    # TODO(synk): switch to lax.fori_loop(..., unroll=True) over wc_ref/bc_ref if
    # n_layers grows large (>~8) to bound live ranges / instruction-stream size.
    for l in range(n_rest):
        y = jnp.dot(y, wc_ref[l], preferred_element_type=jnp.float32) + bc_ref[l]
        y = jnp.maximum(y, 0.0).astype(compute_dtype)

    # session-specific readout
    y = jnp.dot(y, wr_ref[...], preferred_element_type=jnp.float32) + br_ref[...]
    if softplus:
        y = jnp.where(y > 20.0, y, jnp.log1p(jnp.exp(jnp.minimum(y, 20.0))))
    o_ref[...] = y.astype(o_ref.dtype)


# ---------------------------------------------------------------------- param prep


def prepare_session_params(p, *, weight_dtype=jnp.bfloat16):
    """Fuse the embedding into the first core layer (or the readout if n_layers == 0),
    pad feature dims to 128-lane multiples, and cast weights to the MXU dtype.

    Zero padding keeps the math exact: padded hidden features stay 0 through
    Linear+ReLU, and padded output columns are sliced off after the kernel.
    """
    hi = jax.lax.Precision.HIGHEST
    we = jnp.asarray(p["we"], jnp.float32)                        # (in_dim, E)
    be = jnp.asarray(p["be"], jnp.float32).reshape(1, -1)         # (1, E)
    wr = jnp.asarray(p["wr"], jnp.float32)                        # (H, out)
    br = jnp.asarray(p["br"], jnp.float32).reshape(1, -1)         # (1, out)

    wc = p.get("wc", None)
    n_layers = 0
    if wc is not None:
        wc = jnp.asarray(wc, jnp.float32)
        if wc.ndim == 3 and wc.shape[0] > 0:
            n_layers = wc.shape[0]
    if n_layers > 0:
        bc = jnp.asarray(p["bc"], jnp.float32).reshape(n_layers, 1, -1)

    in_dim, emb = we.shape
    hid, out_dim = wr.shape
    # TODO(synk): the stacked (L, H, H) core format assumes embedding_dim == hidden_dim
    # (the torch module's emb!=hid first-layer case is not covered here).
    assert emb == hid, "kernel requires embedding_dim == hidden_dim"

    kp = _round_up(in_dim, LANE)      # lane-dense K for the activation input
    hp = _round_up(hid, LANE)
    op = _round_up(out_dim, LANE)

    if n_layers == 0:
        # Fuse embedding into the readout: y = x @ (We@Wr) + (be@Wr + br)  (exact, f32).
        w_all = jnp.dot(we, wr, precision=hi)
        b_all = jnp.dot(be, wr, precision=hi) + br
        wf = jnp.zeros((kp, op), weight_dtype).at[:in_dim, :out_dim].set(
            w_all.astype(weight_dtype))
        bf = jnp.zeros((1, op), jnp.float32).at[:, :out_dim].set(b_all)
        return dict(kind="single", wf=wf, bf=bf,
                    in_dim=in_dim, out_dim=out_dim, n_layers=0)

    # Fuse embedding into core layer 0 (no nonlinearity between them; exact in f32).
    w0 = jnp.dot(we, wc[0], precision=hi)                          # (in_dim, H)
    b0 = jnp.dot(be, wc[0], precision=hi) + bc[0]                  # (1, H)
    w0p = jnp.zeros((kp, hp), weight_dtype).at[:in_dim, :hid].set(w0.astype(weight_dtype))
    b0p = jnp.zeros((1, hp), jnp.float32).at[:, :hid].set(b0)

    out = dict(kind="core", w0=w0p, b0=b0p, n_rest=n_layers - 1,
               in_dim=in_dim, out_dim=out_dim, n_layers=n_layers)
    if n_layers - 1 > 0:
        wcp = jnp.zeros((n_layers - 1, hp, hp), weight_dtype).at[:, :hid, :hid].set(
            wc[1:].astype(weight_dtype))
        bcp = jnp.zeros((n_layers - 1, 1, hp), jnp.float32).at[:, :, :hid].set(bc[1:])
        out["wc"], out["bc"] = wcp, bcp
    out["wr"] = jnp.zeros((hp, op), weight_dtype).at[:hid, :out_dim].set(
        wr.astype(weight_dtype))
    out["br"] = jnp.zeros((1, op), jnp.float32).at[:, :out_dim].set(br)
    return out


# ------------------------------------------------------------------------- wrapper


def _pick_vmem_limit() -> int:
    """Generation-aware scoped-VMEM limit (~3/4 of physical, capped), 32 MiB fallback."""
    try:
        cap = int(pltpu.get_tpu_info().vmem_capacity_bytes)
        return max(32 * 1024 * 1024, min(cap * 3 // 4, 100 * 1024 * 1024))
    except Exception:
        return 32 * 1024 * 1024


def _weight_spec(arr, buffered: bool):
    """Whole array as one block; same block index every grid step (VMEM-resident)."""
    n = arr.ndim
    idx = lambda i: (0,) * n
    if buffered:
        # Constant-index block: one pipeline buffer suffices (no double buffering),
        # halving resident weight VMEM when the grid has multiple steps.
        return pl.BlockSpec(arr.shape, idx, pipeline_mode=pl.Buffered(buffer_count=1))
    return pl.BlockSpec(arr.shape, idx)


def fc_model_forward(x, prepped, *, readout_type="linear", block_b=512,
                     compute_dtype=jnp.bfloat16, out_dtype=jnp.float32):
    """FCModel forward for one session via a single batch-tiled pallas_call.

    x: [B, in_dim] float32; prepped = prepare_session_params(raw_params).
    """
    # TODO(synk): batch multiple sessions into one pallas_call via scalar-prefetched
    # per-session offsets (and pack two Hp=128 sessions side-by-side in N to fill the
    # 256-wide MXU on v6e/v7x); kept one call per session to preserve the module API.
    assert readout_type in ("linear", "softplus")
    softplus = readout_type == "softplus"

    b, in_dim = x.shape
    assert in_dim == prepped["in_dim"]
    out_dim = prepped["out_dim"]

    if prepped["kind"] == "single":
        weights = (prepped["wf"], prepped["bf"])
        kp = prepped["wf"].shape[0]
        op = prepped["wf"].shape[1]
        kernel = functools.partial(_fc_single_kernel, softplus=softplus)
        flops = 2 * b * kp * op
    else:
        n_rest = prepped["n_rest"]
        kp = prepped["w0"].shape[0]
        hp = prepped["w0"].shape[1]
        op = prepped["wr"].shape[1]
        if n_rest > 0:
            weights = (prepped["w0"], prepped["b0"], prepped["wc"], prepped["bc"],
                       prepped["wr"], prepped["br"])
        else:
            weights = (prepped["w0"], prepped["b0"], prepped["wr"], prepped["br"])
        kernel = functools.partial(_fc_core_kernel, n_rest=n_rest, softplus=softplus,
                                   compute_dtype=compute_dtype)
        flops = 2 * b * (kp * hp + n_rest * hp * hp + hp * op)

    # Batch tile: keep it large; collapse to a single tile when there would be <= 2 grid
    # steps (per-step overhead + duplicate weight DMA would dominate the tiny MXU work).
    tb = min(block_b, _round_up(b, 16))
    if pl.cdiv(b, tb) <= 2:
        tb = _round_up(b, 16)
    bp = _round_up(b, tb)
    n_steps = bp // tb

    # Lane-dense, bf16 activation input: pre-cast (identical to the in-kernel cast the
    # math would otherwise do) and zero-pad both batch and feature dims.
    xk = x.astype(compute_dtype)
    if bp != b or kp != in_dim:
        xk = jnp.pad(xk, ((0, bp - b), (0, kp - in_dim)))

    transcendentals = bp * op if softplus else 0
    bytes_accessed = (int(xk.size) * xk.dtype.itemsize
                      + sum(int(w.size) * w.dtype.itemsize for w in weights)
                      + bp * op * jnp.dtype(out_dtype).itemsize)
    cost = pl.CostEstimate(flops=int(flops), transcendentals=int(transcendentals),
                           bytes_accessed=int(bytes_accessed))

    def build_and_run(use_buffered_weights: bool):
        in_specs = ([pl.BlockSpec((tb, kp), lambda i: (i, 0))]       # activations: pipelined
                    + [_weight_spec(w, use_buffered_weights) for w in weights])
        return pl.pallas_call(
            kernel,
            out_shape=jax.ShapeDtypeStruct((bp, op), out_dtype),
            grid=(n_steps,),
            in_specs=in_specs,
            out_specs=pl.BlockSpec((tb, op), lambda i: (i, 0)),       # lane-dense output
            compiler_params=pltpu.CompilerParams(
                dimension_semantics=("parallel",),     # megacore-shard batch tiles (v7x)
                vmem_limit_bytes=_pick_vmem_limit(),
            ),
            cost_estimate=cost,
        )(xk, *weights)

    use_buffered = n_steps > 1   # single-buffer weights only matter when actually gridded
    try:
        y = build_and_run(use_buffered)
    except Exception:
        if not use_buffered:
            raise
        # Fallback if this Pallas build rejects pipeline_mode=Buffered(1) on inputs.
        y = build_and_run(False)

    return y[:b, :out_dim]


# ------------------------------------------------------------------ init & reference


def init_params(key, sessions, in_dim, embedding_dim, hidden_dim, out_dim, n_layers):
    """Torch-style Linear init (U[-1/sqrt(fan_in), 1/sqrt(fan_in)]), weights stored [in, out]."""
    assert embedding_dim == hidden_dim, "kernel stacks core layers; emb must equal hidden"
    params = {}
    for s in sessions:
        key, k1, k2, k3, k4, k5, k6 = jax.random.split(key, 7)
        be_bound = 1.0 / jnp.sqrt(in_dim[s])
        bc_bound = 1.0 / jnp.sqrt(hidden_dim)
        params[s] = dict(
            we=jax.random.uniform(k1, (in_dim[s], embedding_dim), jnp.float32, -be_bound, be_bound),
            be=jax.random.uniform(k2, (1, embedding_dim), jnp.float32, -be_bound, be_bound),
            wc=jax.random.uniform(k3, (n_layers, hidden_dim, hidden_dim), jnp.float32, -bc_bound, bc_bound),
            bc=jax.random.uniform(k4, (n_layers, hidden_dim), jnp.float32, -bc_bound, bc_bound),
            wr=jax.random.uniform(k5, (hidden_dim, out_dim[s]), jnp.float32, -bc_bound, bc_bound),
            br=jax.random.uniform(k6, (1, out_dim[s]), jnp.float32, -bc_bound, bc_bound),
        )
    return params


def reference_forward(x, raw, *, readout_type="linear"):
    """Pure-JAX f32 reference with the torch FCModel structure (embedding -> core -> readout)."""
    hi = jax.lax.Precision.HIGHEST
    y = jnp.dot(x, raw["we"], precision=hi) + raw["be"]
    wc = raw.get("wc")
    if wc is not None and jnp.ndim(wc) == 3:
        for l in range(wc.shape[0]):
            y = jnp.maximum(jnp.dot(y, wc[l], precision=hi) + raw["bc"][l], 0.0)
    y = jnp.dot(y, raw["wr"], precision=hi) + raw["br"]
    if readout_type == "softplus":
        y = jnp.where(y > 20.0, y, jnp.log1p(jnp.exp(jnp.minimum(y, 20.0))))
    return y


# -------------------------------------------------------------------------------- main


if __name__ == "__main__":
    sessions = ["sessA", "sessB"]
    in_dim = {"sessA": 16, "sessB": 24}
    out_dim = {"sessA": 8, "sessB": 12}
    embedding_dim = hidden_dim = 32
    n_layers = 2

    key = jax.random.PRNGKey(0)
    kparam, kx1, kx2, kx3, kparam0, kx0 = jax.random.split(key, 6)
    raw = init_params(kparam, sessions, in_dim, embedding_dim, hidden_dim, out_dim, n_layers)
    prepped = {s: prepare_session_params(raw[s]) for s in sessions}

    TOL = dict(atol=3e-2, rtol=3e-2)   # bf16 kernel vs f32 reference

    # 1) linear readout, batch collapses to a single grid step
    xA = jax.random.normal(kx1, (256, in_dim["sessA"]), jnp.float32)
    yA = fc_model_forward(xA, prepped["sessA"], readout_type="linear")
    jax.block_until_ready(yA)
    refA = reference_forward(xA, raw["sessA"], readout_type="linear")
    assert yA.shape == (256, out_dim["sessA"])
    assert jnp.allclose(yA, refA, **TOL), "sessA mismatch"

    # 2) softplus readout, ragged batch (padded to one tile)
    xB = jax.random.normal(kx2, (200, in_dim["sessB"]), jnp.float32)
    yB = fc_model_forward(xB, prepped["sessB"], readout_type="softplus")
    jax.block_until_ready(yB)
    refB = reference_forward(xB, raw["sessB"], readout_type="softplus")
    assert yB.shape == (200, out_dim["sessB"])
    assert jnp.allclose(yB, refB, **TOL), "sessB mismatch"

    # 3) multi-tile batch exercising the gridded / single-buffered-weight path (3 x 512)
    xC = jax.random.normal(kx3, (1536, in_dim["sessB"]), jnp.float32)
    yC = fc_model_forward(xC, prepped["sessB"], readout_type="softplus", block_b=512)
    jax.block_until_ready(yC)
    refC = reference_forward(xC, raw["sessB"], readout_type="softplus")
    assert yC.shape == (1536, out_dim["sessB"])
    assert jnp.allclose(yC, refC, **TOL), "multi-tile mismatch"

    # 4) n_layers == 0 path (embedding fused directly into the readout, single matmul)
    raw0 = init_params(kparam0, ["sessA"], in_dim, embedding_dim, hidden_dim, out_dim, 0)
    prepped0 = prepare_session_params(raw0["sessA"])
    x0 = jax.random.normal(kx0, (64, in_dim["sessA"]), jnp.float32)
    y0 = fc_model_forward(x0, prepped0, readout_type="linear")
    jax.block_until_ready(y0)
    ref0 = reference_forward(x0, raw0["sessA"], readout_type="linear")
    assert y0.shape == (64, out_dim["sessA"])
    assert jnp.allclose(y0, ref0, **TOL), "n_layers=0 mismatch"

    print("KERNEL_OK")
</pallas_src>

<mosaic_0001>
module attributes {stable_mosaic.version = 11 : i64} {
  func.func @_fc_core_kernel(%arg0: i32, %arg1: memref<256x128xbf16, #tpu.memory_space<vmem>>, %arg2: memref<128x128xbf16, #tpu.memory_space<vmem>>, %arg3: memref<1x128xf32, #tpu.memory_space<vmem>>, %arg4: memref<1x128x128xbf16, #tpu.memory_space<vmem>>, %arg5: memref<1x1x128xf32, #tpu.memory_space<vmem>>, %arg6: memref<128x128xbf16, #tpu.memory_space<vmem>>, %arg7: memref<1x128xf32, #tpu.memory_space<vmem>>, %arg8: memref<256x128xf32, #tpu.memory_space<vmem>>) attributes {dimension_semantics = [#tpu.dimension_semantics<parallel>], iteration_bounds = array<i64: 1>, scalar_prefetch = 0 : i64, scratch_operands = 0 : i64, tpu.core_type = #tpu.core_type<tc>, window_params = [{transform_indices = @transform_0, window_bounds = array<i64: 256, 128>}, {pipeline_mode = #tpu.pipeline_mode<synchronous>, transform_indices = @transform_1, window_bounds = array<i64: 128, 128>}, {pipeline_mode = #tpu.pipeline_mode<synchronous>, transform_indices = @transform_2, window_bounds = array<i64: 1, 128>}, {pipeline_mode = #tpu.pipeline_mode<synchronous>, transform_indices = @transform_3, window_bounds = array<i64: 1, 128, 128>}, {pipeline_mode = #tpu.pipeline_mode<synchronous>, transform_indices = @transform_4, window_bounds = array<i64: 1, 1, 128>}, {pipeline_mode = #tpu.pipeline_mode<synchronous>, transform_indices = @transform_5, window_bounds = array<i64: 128, 128>}, {pipeline_mode = #tpu.pipeline_mode<synchronous>, transform_indices = @transform_6, window_bounds = array<i64: 1, 128>}, {transform_indices = @transform_7, window_bounds = array<i64: 256, 128>}]} {
    %c0 = arith.constant 0 : index
    %c0_0 = arith.constant 0 : index
    %0 = vector.load %arg1[%c0, %c0_0] : memref<256x128xbf16, #tpu.memory_space<vmem>>, vector<256x128xbf16>
    %c0_1 = arith.constant 0 : index
    %c0_2 = arith.constant 0 : index
    %1 = vector.load %arg2[%c0_1, %c0_2] : memref<128x128xbf16, #tpu.memory_space<vmem>>, vector<128x128xbf16>
    %cst = arith.constant dense<0.000000e+00> : vector<256x128xf32>
    %2 = tpu.matmul %0, %1, %cst {dimension_numbers = #tpu.dot_dimension_numbers<[1], [0], [0], [1], [0, 0, 1, 1], [], []>} : vector<256x128xbf16>, vector<128x128xbf16>, vector<256x128xf32> -> vector<256x128xf32>
    %c0_3 = arith.constant 0 : index
    %c0_4 = arith.constant 0 : index
    %3 = vector.load %arg3[%c0_3, %c0_4] : memref<1x128xf32, #tpu.memory_space<vmem>>, vector<1x128xf32>
    %4 = vector.broadcast %3 : vector<1x128xf32> to vector<256x128xf32>
    %5 = arith.addf %2, %4 : vector<256x128xf32>
    %cst_5 = arith.constant 0.000000e+00 : f32
    %6 = vector.broadcast %cst_5 : f32 to vector<256x128xf32>
    %7 = arith.maximumf %5, %6 : vector<256x128xf32>
    %8 = arith.truncf %7 : vector<256x128xf32> to vector<256x128xbf16>
    %c0_6 = arith.constant 0 : index
    %c0_7 = arith.constant 0 : index
    %c0_8 = arith.constant 0 : index
    %9 = vector.load %arg4[%c0_6, %c0_7, %c0_8] : memref<1x128x128xbf16, #tpu.memory_space<vmem>>, vector<1x128x128xbf16>
    %10 = vector.shape_cast %9 : vector<1x128x128xbf16> to vector<128x128xbf16>
    %cst_9 = arith.constant dense<0.000000e+00> : vector<256x128xf32>
    %11 = tpu.matmul %8, %10, %cst_9 {dimension_numbers = #tpu.dot_dimension_numbers<[1], [0], [0], [1], [0, 0, 1, 1], [], []>} : vector<256x128xbf16>, vector<128x128xbf16>, vector<256x128xf32> -> vector<256x128xf32>
    %c0_10 = arith.constant 0 : index
    %c0_11 = arith.constant 0 : index
    %c0_12 = arith.constant 0 : index
    %12 = vector.load %arg5[%c0_10, %c0_11, %c0_12] : memref<1x1x128xf32, #tpu.memory_space<vmem>>, vector<1x1x128xf32>
    %13 = vector.shape_cast %12 : vector<1x1x128xf32> to vector<1x128xf32>
    %14 = vector.broadcast %13 : vector<1x128xf32> to vector<256x128xf32>
    %15 = arith.addf %11, %14 : vector<256x128xf32>
    %cst_13 = arith.constant 0.000000e+00 : f32
    %16 = vector.broadcast %cst_13 : f32 to vector<256x128xf32>
    %17 = arith.maximumf %15, %16 : vector<256x128xf32>
    %18 = arith.truncf %17 : vector<256x128xf32> to vector<256x128xbf16>
    %c0_14 = arith.constant 0 : index
    %c0_15 = arith.constant 0 : index
    %19 = vector.load %arg6[%c0_14, %c0_15] : memref<128x128xbf16, #tpu.memory_space<vmem>>, vector<128x128xbf16>
    %cst_16 = arith.constant dense<0.000000e+00> : vector<256x128xf32>
    %20 = tpu.matmul %18, %19, %cst_16 {dimension_numbers = #tpu.dot_dimension_numbers<[1], [0], [0], [1], [0, 0, 1, 1], [], []>} : vector<256x128xbf16>, vector<128x128xbf16>, vector<256x128xf32> -> vector<256x128xf32>
    %c0_17 = arith.constant 0 : index
    %c0_18 = arith.constant 0 : index
    %21 = vector.load %arg7[%c0_17, %c0_18] : memref<1x128xf32, #tpu.memory_space<vmem>>, vector<1x128xf32>
    %22 = vector.broadcast %21 : vector<1x128xf32> to vector<256x128xf32>
    %23 = arith.addf %20, %22 : vector<256x128xf32>
    %c0_19 = arith.constant 0 : index
    %c0_20 = arith.constant 0 : index
    %24 = vector.load %arg8[%c0_19, %c0_20] : memref<256x128xf32, #tpu.memory_space<vmem>>, vector<256x128xf32>
    tpu.vector_store %arg8[%c0_19, %c0_20], %23 {strides = array<i32>} : memref<256x128xf32, #tpu.memory_space<vmem>>, vector<256x128xf32>,
    return
  }
  func.func @transform_0(%arg0: i32) -> (i32, i32) {
    %c0_i32 = arith.constant 0 : i32
    %c0_i32_0 = arith.constant 0 : i32
    return %arg0, %c0_i32 : i32, i32
  }
  func.func @transform_1(%arg0: i32) -> (i32, i32) {
    %c0_i32 = arith.constant 0 : i32
    %c0_i32_0 = arith.constant 0 : i32
    %c0_i32_1 = arith.constant 0 : i32
    return %c0_i32, %c0_i32_0 : i32, i32
  }
  func.func @transform_2(%arg0: i32) -> (i32, i32) {
    %c0_i32 = arith.constant 0 : i32
    %c0_i32_0 = arith.constant 0 : i32
    %c0_i32_1 = arith.constant 0 : i32
    return %c0_i32, %c0_i32_0 : i32, i32
  }
  func.func @transform_3(%arg0: i32) -> (i32, i32, i32) {
    %c0_i32 = arith.constant 0 : i32
    %c0_i32_0 = arith.constant 0 : i32
    %c0_i32_1 = arith.constant 0 : i32
    %c0_i32_2 = arith.constant 0 : i32
    return %c0_i32, %c0_i32_0, %c0_i32_1 : i32, i32, i32
  }
  func.func @transform_4(%arg0: i32) -> (i32, i32, i32) {
    %c0_i32 = arith.constant 0 : i32
    %c0_i32_0 = arith.constant 0 : i32
    %c0_i32_1 = arith.constant 0 : i32
    %c0_i32_2 = arith.constant 0 : i32
    return %c0_i32, %c0_i32_0, %c0_i32_1 : i32, i32, i32
  }
  func.func @transform_5(%arg0: i32) -> (i32, i32) {
    %c0_i32 = arith.constant 0 : i32
    %c0_i32_0 = arith.constant 0 : i32
    %c0_i32_1 = arith.constant 0 : i32
    return %c0_i32, %c0_i32_0 : i32, i32
  }
  func.func @transform_6(%arg0: i32) -> (i32, i32) {
    %c0_i32 = arith.constant 0 : i32
    %c0_i32_0 = arith.constant 0 : i32
    %c0_i32_1 = arith.constant 0 : i32
    return %c0_i32, %c0_i32_0 : i32, i32
  }
  func.func @transform_7(%arg0: i32) -> (i32, i32) {
    %c0_i32 = arith.constant 0 : i32
    %c0_i32_0 = arith.constant 0 : i32
    return %arg0, %c0_i32 : i32, i32
  }
}

</mosaic_0001>

<llo_original>
// kernel: tpu_custom_call.1
$region0: #{tpu_custom_call.1}
  #allocation0 [shape = 'u32[]', space=smem, size = 0x4, offset = 0x4, fixed_abs, tag = 'smem constant byte address 0x4 - core index']
  #allocation1 [shape = 'u32[144,128]{1,0:T(1,128)}', space=vmem, size = 0x12000, scoped, tag = 'internal scratch']
  %s0 = inlined_call_operand.hbm [shape: bf16[256,128], index: 0, kind: input, shape index: {}]
  %s1 = inlined_call_operand.hbm [shape: bf16[128,128], index: 1, kind: input, shape index: {}]
  %s2 = inlined_call_operand.vmem [shape: f32[1,128], index: 2, kind: input, shape index: {}]
  %s3 = inlined_call_operand.hbm [shape: bf16[1,128,128], index: 3, kind: input, shape index: {}]
  %s4 = inlined_call_operand.vmem [shape: f32[1,1,128], index: 4, kind: input, shape index: {}]
  %s5 = inlined_call_operand.hbm [shape: bf16[128,128], index: 5, kind: input, shape index: {}]
  %s6 = inlined_call_operand.vmem [shape: f32[1,128], index: 6, kind: input, shape index: {}]
  %s7 = inlined_call_operand.hbm [shape: f32[256,128], index: 7, kind: output, shape index: {}]
  %s8 = sld [smem:[#allocation0]]
  $region54: #{tpu_custom_call.1} parent=0
    _
  %s10 = ssub.s32 1, %s8
  %s11 = scalar_select 0, %s10, %s8
  $region1: #{tpu_custom_call.1} parent=0
    #allocation2 [shape = 'u8[65536]{0}', space=vmem, size = 0x10000, scoped, tag = 'input window, operand 0, single buffered']
    #allocation3 [shape = 's32[1]{0}', space=sflag, size = 0x4, scoped, tag = 'scoped memory for tpu_custom_call.1']
    #allocation4 [shape = 's32[1]{0}', space=sflag, size = 0x4, scoped, tag = 'scoped memory for tpu_custom_call.1']
    #allocation5 [shape = 'u8[32768]{0}', space=vmem, size = 0x8000, scoped, tag = 'input window, operand 1, single buffered']
    #allocation6 [shape = 's32[1]{0}', space=sflag, size = 0x4, scoped, tag = 'scoped memory for tpu_custom_call.1']
    #allocation7 [shape = 'u8[32768]{0}', space=vmem, size = 0x8000, scoped, tag = 'input window, operand 3, single buffered']
    #allocation8 [shape = 'u8[32768]{0}', space=vmem, size = 0x8000, scoped, tag = 'input window, operand 5, single buffered']
    #allocation9 [shape = 's32[1]{0}', space=sflag, size = 0x4, scoped, tag = 'scoped memory for tpu_custom_call.1']
    #allocation10 [shape = 'u8[131072]{0}', space=vmem, size = 0x20000, scoped, tag = 'output window, operand 0, single buffered']
    %12 = vsyncpa [#allocation3], 0
    %13 = vsyncpa [#allocation6], 0
    %14 = vsyncpa [#allocation9], 0
    %15 = vsyncpa [#allocation4], 0
    // Predicated region
    $region2: #{tpu_custom_call.1} parent=1 // pred_check
      _
    $region3: #{tpu_custom_call.1} parent=1 // pred_check_branch
      %17 = sbr.rel (0) target = $region5
    $region4: #{tpu_custom_call.1} parent=1 // pred_region
      %s19 = ssub.s32 2048, 2048
      %20 = vsyncadd [#allocation3], %s19
      %s21 = sshll.u32 [#allocation2], 4
      %s22 = int_to_ptr.vmem [resolvable:$true] %s21
      %27 = dma.hbm_to_vmem [thread:$0]  %s0, 2048, %s22, [#allocation3], 64, 64, 4
    $region5: #{tpu_custom_call.1} parent=1 // pred_fallthru
      _
    // Predicated region
    $region6: #{tpu_custom_call.1} parent=1 // pred_check
      _
    $region7: #{tpu_custom_call.1} parent=1 // pred_check_branch
      %29 = sbr.rel (0) target = $region9
    $region8: #{tpu_custom_call.1} parent=1 // pred_region
      %s31 = ssub.s32 1024, 1024
      %32 = vsyncadd [#allocation6], %s31
      %s33 = sshll.u32 [#allocation5], 4
      %s34 = int_to_ptr.vmem [resolvable:$true] %s33
      %39 = dma.hbm_to_vmem [thread:$0]  %s1, 1024, %s34, [#allocation6], 64, 64, 4
    $region9: #{tpu_custom_call.1} parent=1 // pred_fallthru
      _
    // Predicated region
    $region10: #{tpu_custom_call.1} parent=1 // pred_check
      _
    $region11: #{tpu_custom_call.1} parent=1 // pred_check_branch
      %41 = sbr.rel (0) target = $region13
    $region12: #{tpu_custom_call.1} parent=1 // pred_region
      _
    $region13: #{tpu_custom_call.1} parent=1 // pred_fallthru
      _
    // Predicated region
    $region14: #{tpu_custom_call.1} parent=1 // pred_check
      _
    $region15: #{tpu_custom_call.1} parent=1 // pred_check_branch
      %43 = sbr.rel (0) target = $region17
    $region16: #{tpu_custom_call.1} parent=1 // pred_region
      %s45 = ssub.s32 1024, 1024
      %46 = vsyncadd [#allocation6], %s45
      %s47 = sshll.u32 [#allocation7], 4
      %s48 = int_to_ptr.vmem [resolvable:$true] %s47
      %53 = dma.hbm_to_vmem [thread:$0]  %s3, 1024, %s48, [#allocation6], 64, 64, 4
    $region17: #{tpu_custom_call.1} parent=1 // pred_fallthru
      _
    // Predicated region
    $region18: #{tpu_custom_call.1} parent=1 // pred_check
      _
    $region19: #{tpu_custom_call.1} parent=1 // pred_check_branch
      %55 = sbr.rel (0) target = $region21
    $region20: #{tpu_custom_call.1} parent=1 // pred_region
      _
    $region21: #{tpu_custom_call.1} parent=1 // pred_fallthru
      _
    // Predicated region
    $region22: #{tpu_custom_call.1} parent=1 // pred_check
      _
    $region23: #{tpu_custom_call.1} parent=1 // pred_check_branch
      %57 = sbr.rel (0) target = $region25
    $region24: #{tpu_custom_call.1} parent=1 // pred_region
      %s59 = ssub.s32 1024, 1024
      %60 = vsyncadd [#allocation9], %s59
      %s61 = sshll.u32 [#allocation8], 4
      %s62 = int_to_ptr.vmem [resolvable:$true] %s61
      %67 = dma.hbm_to_vmem [thread:$0]  %s5, 1024, %s62, [#allocation9], 64, 64, 4
    $region25: #{tpu_custom_call.1} parent=1 // pred_fallthru
      _
    // Predicated region
    $region26: #{tpu_custom_call.1} parent=1 // pred_check
      _
    $region27: #{tpu_custom_call.1} parent=1 // pred_check_branch
      %69 = sbr.rel (0) target = $region29
    $region28: #{tpu_custom_call.1} parent=1 // pred_region
      _
    $region29: #{tpu_custom_call.1} parent=1 // pred_fallthru
      _
    // Predicated region
    $region30: #{tpu_custom_call.1} parent=1 // pred_check
      _
    $region31: #{tpu_custom_call.1} parent=1 // pred_check_branch
      %71 = sbr.rel (0) target = $region33
    $region32: #{tpu_custom_call.1} parent=1 // pred_region
      %72 = dma.done [#allocation3], 2048
    $region33: #{tpu_custom_call.1} parent=1 // pred_fallthru
      _
    // Predicated region
    $region34: #{tpu_custom_call.1} parent=1 // pred_check
      _
    $region35: #{tpu_custom_call.1} parent=1 // pred_check_branch
      %74 = sbr.rel (0) target = $region37
    $region36: #{tpu_custom_call.1} parent=1 // pred_region
      %75 = dma.done [#allocation6], 1024
    $region37: #{tpu_custom_call.1} parent=1 // pred_fallthru
      _
    // Predicated region
    $region38: #{tpu_custom_call.1} parent=1 // pred_check
      _
    $region39: #{tpu_custom_call.1} parent=1 // pred_check_branch
      %77 = sbr.rel (0) target = $region41
    $region40: #{tpu_custom_call.1} parent=1 // pred_region
      %78 = dma.done [#allocation6], 1024
    $region41: #{tpu_custom_call.1} parent=1 // pred_fallthru
      _
    // Predicated region
    $region42: #{tpu_custom_call.1} parent=1 // pred_check
      _
    $region43: #{tpu_custom_call.1} parent=1 // pred_check_branch
      %80 = sbr.rel (0) target = $region45
    $region44: #{tpu_custom_call.1} parent=1 // pred_region
      %81 = dma.done [#allocation9], 1024
    $region45: #{tpu_custom_call.1} parent=1 // pred_fallthru
      _
    %v83 = vld [vmem:[#allocation2] sm:$0xf]
    %v84 = vld [vmem:[#allocation2 + $0x4] sm:$0xf]
    %v85 = vld [vmem:[#allocation2 + $0x8] sm:$0xf]
    %v86 = vld [vmem:[#allocation2 + $0xc] sm:$0xf]
    %v87 = vld [vmem:[#allocation2 + $0x10] sm:$0xf]
    %v88 = vld [vmem:[#allocation2 + $0x14] sm:$0xf]
    %v89 = vld [vmem:[#allocation2 + $0x18] sm:$0xf]
    %v90 = vld [vmem:[#allocation2 + $0x1c] sm:$0xf]
    %v91 = vld [vmem:[#allocation2 + $0x20] sm:$0xf]
    %v92 = vld [vmem:[#allocation2 + $0x24] sm:$0xf]
    %v93 = vld [vmem:[#allocation2 + $0x28] sm:$0xf]
    %v94 = vld [vmem:[#allocation2 + $0x2c] sm:$0xf]
    %v95 = vld [vmem:[#allocation2 + $0x30] sm:$0xf]
    %v96 = vld [vmem:[#allocation2 + $0x34] sm:$0xf]
    %v97 = vld [vmem:[#allocation2 + $0x38] sm:$0xf]
    %v98 = vld [vmem:[#allocation2 + $0x3c] sm:$0xf]
    %v99 = vld [vmem:[#allocation2 + $0x40] sm:$0xf]
    %v100 = vld [vmem:[#allocation2 + $0x44] sm:$0xf]
    %v101 = vld [vmem:[#allocation2 + $0x48] sm:$0xf]
    %v102 = vld [vmem:[#allocation2 + $0x4c] sm:$0xf]
    %v103 = vld [vmem:[#allocation2 + $0x50] sm:$0xf]
    %v104 = vld [vmem:[#allocation2 + $0x54] sm:$0xf]
    %v105 = vld [vmem:[#allocation2 + $0x58] sm:$0xf]
    %v106 = vld [vmem:[#allocation2 + $0x5c] sm:$0xf]
    %v107 = vld [vmem:[#allocation2 + $0x60] sm:$0xf]
    %v108 = vld [vmem:[#allocation2 + $0x64] sm:$0xf]
    %v109 = vld [vmem:[#allocation2 + $0x68] sm:$0xf]
    %v110 = vld [vmem:[#allocation2 + $0x6c] sm:$0xf]
    %v111 = vld [vmem:[#allocation2 + $0x70] sm:$0xf]
    %v112 = vld [vmem:[#allocation2 + $0x74] sm:$0xf]
    %v113 = vld [vmem:[#allocation2 + $0x78] sm:$0xf]
    %v114 = vld [vmem:[#allocation2 + $0x7c] sm:$0xf]
    %v115 = vld [vmem:[#allocation5] sm:$0xf]
    %v116 = vld [vmem:[#allocation5 + $0x4] sm:$0xf]
    %v117 = vld [vmem:[#allocation5 + $0x8] sm:$0xf]
    %v118 = vld [vmem:[#allocation5 + $0xc] sm:$0xf]
    %v119 = vld [vmem:[#allocation5 + $0x10] sm:$0xf]
    %v120 = vld [vmem:[#allocation5 + $0x14] sm:$0xf]
    %v121 = vld [vmem:[#allocation5 + $0x18] sm:$0xf]
    %v122 = vld [vmem:[#allocation5 + $0x1c] sm:$0xf]
    %v123 = vld [vmem:[#allocation5 + $0x20] sm:$0xf]
    %v124 = vld [vmem:[#allocation5 + $0x24] sm:$0xf]
    %v125 = vld [vmem:[#allocation5 + $0x28] sm:$0xf]
    %v126 = vld [vmem:[#allocation5 + $0x2c] sm:$0xf]
    %v127 = vld [vmem:[#allocation5 + $0x30] sm:$0xf]
    %v128 = vld [vmem:[#allocation5 + $0x34] sm:$0xf]
    %v129 = vld [vmem:[#allocation5 + $0x38] sm:$0xf]
    %v130 = vld [vmem:[#allocation5 + $0x3c] sm:$0xf]
    %v131 = vld [vmem:[%s2] sm:$0x1]
    %v133 = vlaneseq
    %v134 = vshrl.u32 %v133, 7
    %v135 = vsub.s32 0, %v134
    %v136 = vrot.slane %v131, %v135
    %v170 = vunpack.c.l.b16 %v83
    %v171 = vunpack.c.l.b16 %v84
    %v172 = vunpack.c.l.b16 %v85
    %v173 = vunpack.c.l.b16 %v86
    %v174 = vunpack.c.l.b16 %v87
    %v175 = vunpack.c.l.b16 %v88
    %v176 = vunpack.c.l.b16 %v89
    %v177 = vunpack.c.l.b16 %v90
    %v178 = vunpack.c.l.b16 %v91
    %v179 = vunpack.c.l.b16 %v92
    %v180 = vunpack.c.l.b16 %v93
    %v181 = vunpack.c.l.b16 %v94
    %v182 = vunpack.c.l.b16 %v95
    %v183 = vunpack.c.l.b16 %v96
    %v184 = vunpack.c.l.b16 %v97
    %v185 = vunpack.c.l.b16 %v98
    %v186 = vunpack.c.l.b16 %v99
    %v187 = vunpack.c.l.b16 %v100
    %v188 = vunpack.c.l.b16 %v101
    %v189 = vunpack.c.l.b16 %v102
    %v190 = vunpack.c.l.b16 %v103
    %v191 = vunpack.c.l.b16 %v104
    %v192 = vunpack.c.l.b16 %v105
    %v193 = vunpack.c.l.b16 %v106
    %v194 = vunpack.c.l.b16 %v107
    %v195 = vunpack.c.l.b16 %v108
    %v196 = vunpack.c.l.b16 %v109
    %v197 = vunpack.c.l.b16 %v110
    %v198 = vunpack.c.l.b16 %v111
    %v199 = vunpack.c.l.b16 %v112
    %v200 = vunpack.c.l.b16 %v113
    %v201 = vunpack.c.l.b16 %v114
    %v202 = vpack.c.b16 %v171, %v170
    %v203 = vpack.c.b16 %v173, %v172
    %v204 = vpack.c.b16 %v175, %v174
    %v205 = vpack.c.b16 %v177, %v176
    %v206 = vpack.c.b16 %v179, %v178
    %v207 = vpack.c.b16 %v181, %v180
    %v208 = vpack.c.b16 %v183, %v182
    %v209 = vpack.c.b16 %v185, %v184
    %v210 = vpack.c.b16 %v187, %v186
    %v211 = vpack.c.b16 %v189, %v188
    %v212 = vpack.c.b16 %v191, %v190
    %v213 = vpack.c.b16 %v193, %v192
    %v214 = vpack.c.b16 %v195, %v194
    %v215 = vpack.c.b16 %v197, %v196
    %v216 = vpack.c.b16 %v199, %v198
    %v217 = vpack.c.b16 %v201, %v200
    %v250 = vunpack.c.l.b16 %v115
    %v251 = vunpack.c.l.b16 %v116
    %v252 = vunpack.c.l.b16 %v117
    %v253 = vunpack.c.l.b16 %v118
    %v254 = vunpack.c.l.b16 %v119
    %v255 = vunpack.c.l.b16 %v120
    %v256 = vunpack.c.l.b16 %v121
    %v257 = vunpack.c.l.b16 %v122
    %v258 = vunpack.c.l.b16 %v123
    %v259 = vunpack.c.l.b16 %v124
    %v260 = vunpack.c.l.b16 %v125
    %v261 = vunpack.c.l.b16 %v126
    %v262 = vunpack.c.l.b16 %v127
    %v263 = vunpack.c.l.b16 %v128
    %v264 = vunpack.c.l.b16 %v129
    %v265 = vunpack.c.l.b16 %v130
    %v266 = vpack.c.b16 %v251, %v250
    %v267 = vpack.c.b16 %v253, %v252
    %v268 = vpack.c.b16 %v255, %v254
    %v269 = vpack.c.b16 %v257, %v256
    %v270 = vpack.c.b16 %v259, %v258
    %v271 = vpack.c.b16 %v261, %v260
    %v272 = vpack.c.b16 %v263, %v262
    %v273 = vpack.c.b16 %v265, %v264
    %282 = vmatprep.subr.bf16.mxu0 0
    %283 = vmatpush1.bf16.msra.mxu0 %v273
    %284 = vmatprep.subr.bf16.mxu0 0
    %285 = vmatpush1.bf16.msra.mxu0 %v272
    %286 = vmatprep.subr.bf16.mxu0 0
    %287 = vmatpush1.bf16.msra.mxu0 %v271
    %288 = vmatprep.subr.bf16.mxu0 0
    %289 = vmatpush1.bf16.msra.mxu0 %v270
    %290 = vmatprep.subr.bf16.mxu0 0
    %291 = vmatpush1.bf16.msra.mxu0 %v269
    %292 = vmatprep.subr.bf16.mxu0 0
    %293 = vmatpush1.bf16.msra.mxu0 %v268
    %294 = vmatprep.subr.bf16.mxu0 0
    %295 = vmatpush1.bf16.msra.mxu0 %v267
    %296 = vmatprep.subr.bf16.mxu0 0
    %297 = vmatpush1.bf16.msra.mxu0 %v266
    %298 = vmatprep.subr.bf16.mxu0 0
    %299 = vmatpush2.bf16.msra.mxu0 0
    %300 = vmatprep.subr.bf16.mxu0 0
    %301 = vmatpush2.bf16.msra.mxu0 0
    %302 = vmatprep.subr.bf16.mxu0 0
    %303 = vmatpush2.bf16.msra.mxu0 0
    %304 = vmatprep.subr.bf16.mxu0 0
    %305 = vmatpush2.bf16.msra.mxu0 0
    %306 = vmatprep.subr.bf16.mxu0 0
    %307 = vmatpush2.bf16.msra.mxu0 0
    %308 = vmatprep.subr.bf16.mxu0 0
    %309 = vmatpush2.bf16.msra.mxu0 0
    %310 = vmatprep.subr.bf16.mxu0 0
    %311 = vmatpush2.bf16.msra.mxu0 0
    %312 = vmatprep.subr.bf16.mxu0 0
    %313 = vmatpush2.bf16.msra.mxu0 0
    %314 = vmatprep.mubr.bf16.mxu0 0
    %315 = vmatmul.mubr.bf16.gmra.mxu0 %v202
    %v316 = vpop.f32.mrf.mxu0
    %v317 = vadd.f32 %v136, %v316
    %v318 = vpop.f32.mrf.mxu0
    %v319 = vpop.f32.mrf.mxu0
    %v320 = vadd.f32 %v136, %v319
    %v321 = vpop.f32.mrf.mxu0
    %322 = vmatprep.mubr.bf16.mxu0 0
    %323 = vmatmul.mubr.bf16.gmra.mxu0 %v203
    %v324 = vpop.f32.mrf.mxu0
    %v325 = vadd.f32 %v136, %v324
    %v326 = vpop.f32.mrf.mxu0
    %v327 = vpop.f32.mrf.mxu0
    %v328 = vadd.f32 %v136, %v327
    %v329 = vpop.f32.mrf.mxu0
    %330 = vmatprep.mubr.bf16.mxu0 0
    %331 = vmatmul.mubr.bf16.gmra.mxu0 %v204
    %v332 = vpop.f32.mrf.mxu0
    %v333 = vadd.f32 %v136, %v332
    %v334 = vpop.f32.mrf.mxu0
    %v335 = vpop.f32.mrf.mxu0
    %v336 = vadd.f32 %v136, %v335
    %v337 = vpop.f32.mrf.mxu0
    %338 = vmatprep.mubr.bf16.mxu0 0
    %339 = vmatmul.mubr.bf16.gmra.mxu0 %v205
    %v340 = vpop.f32.mrf.mxu0
    %v341 = vadd.f32 %v136, %v340
    %v342 = vpop.f32.mrf.mxu0
    %v343 = vpop.f32.mrf.mxu0
    %v344 = vadd.f32 %v136, %v343
    %v345 = vpop.f32.mrf.mxu0
    %346 = vmatprep.mubr.bf16.mxu0 0
    %347 = vmatmul.mubr.bf16.gmra.mxu0 %v206
    %v348 = vpop.f32.mrf.mxu0
    %v349 = vadd.f32 %v136, %v348
    %v350 = vpop.f32.mrf.mxu0
    %v351 = vpop.f32.mrf.mxu0
    %v352 = vadd.f32 %v136, %v351
    %v353 = vpop.f32.mrf.mxu0
    %354 = vmatprep.mubr.bf16.mxu0 0
    %355 = vmatmul.mubr.bf16.gmra.mxu0 %v207
    %v356 = vpop.f32.mrf.mxu0
    %v357 = vadd.f32 %v136, %v356
    %v358 = vpop.f32.mrf.mxu0
    %v359 = vpop.f32.mrf.mxu0
    %v360 = vadd.f32 %v136, %v359
    %v361 = vpop.f32.mrf.mxu0
    %362 = vmatprep.mubr.bf16.mxu0 0
    %363 = vmatmul.mubr.bf16.gmra.mxu0 %v208
    %v364 = vpop.f32.mrf.mxu0
    %v365 = vadd.f32 %v136, %v364
    %v366 = vpop.f32.mrf.mxu0
    %v367 = vpop.f32.mrf.mxu0
    %v368 = vadd.f32 %v136, %v367
    %v369 = vpop.f32.mrf.mxu0
    %370 = vmatprep.mubr.bf16.mxu0 0
    %371 = vmatmul.mubr.bf16.gmra.mxu0 %v209
    %v372 = vpop.f32.mrf.mxu0
    %v373 = vadd.f32 %v136, %v372
    %v374 = vpop.f32.mrf.mxu0
    %v375 = vpop.f32.mrf.mxu0
    %v376 = vadd.f32 %v136, %v375
    %v377 = vpop.f32.mrf.mxu0
    %378 = vmatprep.mubr.bf16.mxu0 0
    %379 = vmatmul.mubr.bf16.gmra.mxu0 %v210
    %v380 = vpop.f32.mrf.mxu0
    %v381 = vadd.f32 %v136, %v380
    %v382 = vpop.f32.mrf.mxu0
    %v383 = vpop.f32.mrf.mxu0
    %v384 = vadd.f32 %v136, %v383
    %v385 = vpop.f32.mrf.mxu0
    %386 = vmatprep.mubr.bf16.mxu0 0
    %387 = vmatmul.mubr.bf16.gmra.mxu0 %v211
    %v388 = vpop.f32.mrf.mxu0
    %v389 = vadd.f32 %v136, %v388
    %v390 = vpop.f32.mrf.mxu0
    %v391 = vpop.f32.mrf.mxu0
    %v392 = vadd.f32 %v136, %v391
    %v393 = vpop.f32.mrf.mxu0
    %394 = vmatprep.mubr.bf16.mxu0 0
    %395 = vmatmul.mubr.bf16.gmra.mxu0 %v212
    %v396 = vpop.f32.mrf.mxu0
    %v397 = vadd.f32 %v136, %v396
    %v398 = vpop.f32.mrf.mxu0
    %v399 = vpop.f32.mrf.mxu0
    %v400 = vadd.f32 %v136, %v399
    %v401 = vpop.f32.mrf.mxu0
    %402 = vmatprep.mubr.bf16.mxu0 0
    %403 = vmatmul.mubr.bf16.gmra.mxu0 %v213
    %v404 = vpop.f32.mrf.mxu0
    %v405 = vadd.f32 %v136, %v404
    %v406 = vpop.f32.mrf.mxu0
    %v407 = vpop.f32.mrf.mxu0
    %v408 = vadd.f32 %v136, %v407
    %v409 = vpop.f32.mrf.mxu0
    %410 = vmatprep.mubr.bf16.mxu0 0
    %411 = vmatmul.mubr.bf16.gmra.mxu0 %v214
    %v412 = vpop.f32.mrf.mxu0
    %v413 = vadd.f32 %v136, %v412
    %v414 = vpop.f32.mrf.mxu0
    %v415 = vpop.f32.mrf.mxu0
    %v416 = vadd.f32 %v136, %v415
    %v417 = vpop.f32.mrf.mxu0
    %418 = vmatprep.mubr.bf16.mxu0 0
    %419 = vmatmul.mubr.bf16.gmra.mxu0 %v215
    %v420 = vpop.f32.mrf.mxu0
    %v421 = vadd.f32 %v136, %v420
    %v422 = vpop.f32.mrf.mxu0
    %v423 = vpop.f32.mrf.mxu0
    %v424 = vadd.f32 %v136, %v423
    %v425 = vpop.f32.mrf.mxu0
    %426 = vmatprep.mubr.bf16.mxu0 0
    %427 = vmatmul.mubr.bf16.gmra.mxu0 %v216
    %v428 = vpop.f32.mrf.mxu0
    %v429 = vadd.f32 %v136, %v428
    %v430 = vpop.f32.mrf.mxu0
    %v431 = vpop.f32.mrf.mxu0
    %v432 = vadd.f32 %v136, %v431
    %v433 = vpop.f32.mrf.mxu0
    %434 = vmatprep.mubr.bf16.mxu0 0
    %435 = vmatmul.mubr.bf16.gmra.mxu0 %v217
    %v436 = vpop.f32.mrf.mxu0
    %v437 = vadd.f32 %v136, %v436
    %v438 = vpop.f32.mrf.mxu0
    %v439 = vpop.f32.mrf.mxu0
    %v440 = vadd.f32 %v136, %v439
    %v441 = vpop.f32.mrf.mxu0
    %442 = vdwg.mxu0
    %v443 = vmax.f32 %v317, 0.0
    %v444 = vmax.f32 %v320, 0.0
    %v445 = vmax.f32 %v325, 0.0
    %v446 = vmax.f32 %v328, 0.0
    %v447 = vmax.f32 %v333, 0.0
    %v448 = vmax.f32 %v336, 0.0
    %v449 = vmax.f32 %v341, 0.0
    %v450 = vmax.f32 %v344, 0.0
    %v451 = vmax.f32 %v349, 0.0
    %v452 = vmax.f32 %v352, 0.0
    %v453 = vmax.f32 %v357, 0.0
    %v454 = vmax.f32 %v360, 0.0
    %v455 = vmax.f32 %v365, 0.0
    %v456 = vmax.f32 %v368, 0.0
    %v457 = vmax.f32 %v373, 0.0
    %v458 = vmax.f32 %v376, 0.0
    %v459 = vmax.f32 %v381, 0.0
    %v460 = vmax.f32 %v384, 0.0
    %v461 = vmax.f32 %v389, 0.0
    %v462 = vmax.f32 %v392, 0.0
    %v463 = vmax.f32 %v397, 0.0
    %v464 = vmax.f32 %v400, 0.0
    %v465 = vmax.f32 %v405, 0.0
    %v466 = vmax.f32 %v408, 0.0
    %v467 = vmax.f32 %v413, 0.0
    %v468 = vmax.f32 %v416, 0.0
    %v469 = vmax.f32 %v421, 0.0
    %v470 = vmax.f32 %v424, 0.0
    %v471 = vmax.f32 %v429, 0.0
    %v472 = vmax.f32 %v432, 0.0
    %v473 = vmax.f32 %v437, 0.0
    %v474 = vmax.f32 %v440, 0.0
    %v475 = vpack.c.bf16 %v444, %v443
    %v476 = vpack.c.bf16 %v446, %v445
    %v477 = vpack.c.bf16 %v448, %v447
    %v478 = vpack.c.bf16 %v450, %v449
    %v479 = vpack.c.bf16 %v452, %v451
    %v480 = vpack.c.bf16 %v454, %v453
    %v481 = vpack.c.bf16 %v456, %v455
    %v482 = vpack.c.bf16 %v458, %v457
    %v483 = vpack.c.bf16 %v460, %v459
    %v484 = vpack.c.bf16 %v462, %v461
    %v485 = vpack.c.bf16 %v464, %v463
    %v486 = vpack.c.bf16 %v466, %v465
    %v487 = vpack.c.bf16 %v468, %v467
    %v488 = vpack.c.bf16 %v470, %v469
    %v489 = vpack.c.bf16 %v472, %v471
    %v490 = vpack.c.bf16 %v474, %v473
    %v491 = vld [vmem:[#allocation7] sm:$0xf]
    %v492 = vld [vmem:[#allocation7 + $0x4] sm:$0xf]
    %v493 = vld [vmem:[#allocation7 + $0x8] sm:$0xf]
    %v494 = vld [vmem:[#allocation7 + $0xc] sm:$0xf]
    %v495 = vld [vmem:[#allocation7 + $0x10] sm:$0xf]
    %v496 = vld [vmem:[#allocation7 + $0x14] sm:$0xf]
    %v497 = vld [vmem:[#allocation7 + $0x18] sm:$0xf]
    %v498 = vld [vmem:[#allocation7 + $0x1c] sm:$0xf]
    %v499 = vld [vmem:[#allocation7 + $0x20] sm:$0xf]
    %v500 = vld [vmem:[#allocation7 + $0x24] sm:$0xf]
    %v501 = vld [vmem:[#allocation7 + $0x28] sm:$0xf]
    %v502 = vld [vmem:[#allocation7 + $0x2c] sm:$0xf]
    %v503 = vld [vmem:[#allocation7 + $0x30] sm:$0xf]
    %v504 = vld [vmem:[#allocation7 + $0x34] sm:$0xf]
    %v505 = vld [vmem:[#allocation7 + $0x38] sm:$0xf]
    %v506 = vld [vmem:[#allocation7 + $0x3c] sm:$0xf]
    %v507 = vld [vmem:[%s4] sm:$0x1]
    %v509 = vlaneseq
    %v510 = vshrl.u32 %v509, 7
    %v511 = vsub.s32 0, %v510
    %v512 = vrot.slane %v507, %v511
    %v530 = vunpack.c.l.b16 %v491
    %v531 = vunpack.c.l.b16 %v492
    %v532 = vunpack.c.l.b16 %v493
    %v533 = vunpack.c.l.b16 %v494
    %v534 = vunpack.c.l.b16 %v495
    %v535 = vunpack.c.l.b16 %v496
    %v536 = vunpack.c.l.b16 %v497
    %v537 = vunpack.c.l.b16 %v498
    %v538 = vunpack.c.l.b16 %v499
    %v539 = vunpack.c.l.b16 %v500
    %v540 = vunpack.c.l.b16 %v501
    %v541 = vunpack.c.l.b16 %v502
    %v542 = vunpack.c.l.b16 %v503
    %v543 = vunpack.c.l.b16 %v504
    %v544 = vunpack.c.l.b16 %v505
    %v545 = vunpack.c.l.b16 %v506
    %v546 = vpack.c.b16 %v531, %v530
    %v547 = vpack.c.b16 %v533, %v532
    %v548 = vpack.c.b16 %v535, %v534
    %v549 = vpack.c.b16 %v537, %v536
    %v550 = vpack.c.b16 %v539, %v538
    %v551 = vpack.c.b16 %v541, %v540
    %v552 = vpack.c.b16 %v543, %v542
    %v553 = vpack.c.b16 %v545, %v544
    %562 = vmatprep.subr.bf16.mxu0 0
    %563 = vmatpush1.bf16.msra.mxu0 %v553
    %564 = vmatprep.subr.bf16.mxu0 0
    %565 = vmatpush1.bf16.msra.mxu0 %v552
    %566 = vmatprep.subr.bf16.mxu0 0
    %567 = vmatpush1.bf16.msra.mxu0 %v551
    %568 = vmatprep.subr.bf16.mxu0 0
    %569 = vmatpush1.bf16.msra.mxu0 %v550
    %570 = vmatprep.subr.bf16.mxu0 0
    %571 = vmatpush1.bf16.msra.mxu0 %v549
    %572 = vmatprep.subr.bf16.mxu0 0
    %573 = vmatpush1.bf16.msra.mxu0 %v548
    %574 = vmatprep.subr.bf16.mxu0 0
    %575 = vmatpush1.bf16.msra.mxu0 %v547
    %576 = vmatprep.subr.bf16.mxu0 0
    %577 = vmatpush1.bf16.msra.mxu0 %v546
    %578 = vmatprep.subr.bf16.mxu0 0
    %579 = vmatpush2.bf16.msra.mxu0 0
    %580 = vmatprep.subr.bf16.mxu0 0
    %581 = vmatpush2.bf16.msra.mxu0 0
    %582 = vmatprep.subr.bf16.mxu0 0
    %583 = vmatpush2.bf16.msra.mxu0 0
    %584 = vmatprep.subr.bf16.mxu0 0
    %585 = vmatpush2.bf16.msra.mxu0 0
    %586 = vmatprep.subr.bf16.mxu0 0
    %587 = vmatpush2.bf16.msra.mxu0 0
    %588 = vmatprep.subr.bf16.mxu0 0
    %589 = vmatpush2.bf16.msra.mxu0 0
    %590 = vmatprep.subr.bf16.mxu0 0
    %591 = vmatpush2.bf16.msra.mxu0 0
    %592 = vmatprep.subr.bf16.mxu0 0
    %593 = vmatpush2.bf16.msra.mxu0 0
    %594 = vmatprep.mubr.bf16.mxu0 0
    %595 = vmatmul.mubr.bf16.gmra.mxu0 %v475
    %v596 = vpop.f32.mrf.mxu0
    %v597 = vadd.f32 %v512, %v596
    %v598 = vpop.f32.mrf.mxu0
    %v599 = vpop.f32.mrf.mxu0
    %v600 = vadd.f32 %v512, %v599
    %v601 = vpop.f32.mrf.mxu0
    %602 = vmatprep.mubr.bf16.mxu0 0
    %603 = vmatmul.mubr.bf16.gmra.mxu0 %v476
    %v604 = vpop.f32.mrf.mxu0
    %v605 = vadd.f32 %v512, %v604
    %v606 = vpop.f32.mrf.mxu0
    %v607 = vpop.f32.mrf.mxu0
    %v608 = vadd.f32 %v512, %v607
    %v609 = vpop.f32.mrf.mxu0
    %610 = vmatprep.mubr.bf16.mxu0 0
    %611 = vmatmul.mubr.bf16.gmra.mxu0 %v477
    %v612 = vpop.f32.mrf.mxu0
    %v613 = vadd.f32 %v512, %v612
    %v614 = vpop.f32.mrf.mxu0
    %v615 = vpop.f32.mrf.mxu0
    %v616 = vadd.f32 %v512, %v615
    %v617 = vpop.f32.mrf.mxu0
    %618 = vmatprep.mubr.bf16.mxu0 0
    %619 = vmatmul.mubr.bf16.gmra.mxu0 %v478
    %v620 = vpop.f32.mrf.mxu0
    %v621 = vadd.f32 %v512, %v620
    %v622 = vpop.f32.mrf.mxu0
    %v623 = vpop.f32.mrf.mxu0
    %v624 = vadd.f32 %v512, %v623
    %v625 = vpop.f32.mrf.mxu0
    %626 = vmatprep.mubr.bf16.mxu0 0
    %627 = vmatmul.mubr.bf16.gmra.mxu0 %v479
    %v628 = vpop.f32.mrf.mxu0
    %v629 = vadd.f32 %v512, %v628
    %v630 = vpop.f32.mrf.mxu0
    %v631 = vpop.f32.mrf.mxu0
    %v632 = vadd.f32 %v512, %v631
    %v633 = vpop.f32.mrf.mxu0
    %634 = vmatprep.mubr.bf16.mxu0 0
    %635 = vmatmul.mubr.bf16.gmra.mxu0 %v480
    %v636 = vpop.f32.mrf.mxu0
    %v637 = vadd.f32 %v512, %v636
    %v638 = vpop.f32.mrf.mxu0
    %v639 = vpop.f32.mrf.mxu0
    %v640 = vadd.f32 %v512, %v639
    %v641 = vpop.f32.mrf.mxu0
    %642 = vmatprep.mubr.bf16.mxu0 0
    %643 = vmatmul.mubr.bf16.gmra.mxu0 %v481
    %v644 = vpop.f32.mrf.mxu0
    %v645 = vadd.f32 %v512, %v644
    %v646 = vpop.f32.mrf.mxu0
    %v647 = vpop.f32.mrf.mxu0
    %v648 = vadd.f32 %v512, %v647
    %v649 = vpop.f32.mrf.mxu0
    %650 = vmatprep.mubr.bf16.mxu0 0
    %651 = vmatmul.mubr.bf16.gmra.mxu0 %v482
    %v652 = vpop.f32.mrf.mxu0
    %v653 = vadd.f32 %v512, %v652
    %v654 = vpop.f32.mrf.mxu0
    %v655 = vpop.f32.mrf.mxu0
    %v656 = vadd.f32 %v512, %v655
    %v657 = vpop.f32.mrf.mxu0
    %658 = vmatprep.mubr.bf16.mxu0 0
    %659 = vmatmul.mubr.bf16.gmra.mxu0 %v483
    %v660 = vpop.f32.mrf.mxu0
    %v661 = vadd.f32 %v512, %v660
    %v662 = vpop.f32.mrf.mxu0
    %v663 = vpop.f32.mrf.mxu0
    %v664 = vadd.f32 %v512, %v663
    %v665 = vpop.f32.mrf.mxu0
    %666 = vmatprep.mubr.bf16.mxu0 0
    %667 = vmatmul.mubr.bf16.gmra.mxu0 %v484
    %v668 = vpop.f32.mrf.mxu0
    %v669 = vadd.f32 %v512, %v668
    %v670 = vpop.f32.mrf.mxu0
    %v671 = vpop.f32.mrf.mxu0
    %v672 = vadd.f32 %v512, %v671
    %v673 = vpop.f32.mrf.mxu0
    %674 = vmatprep.mubr.bf16.mxu0 0
    %675 = vmatmul.mubr.bf16.gmra.mxu0 %v485
    %v676 = vpop.f32.mrf.mxu0
    %v677 = vadd.f32 %v512, %v676
    %v678 = vpop.f32.mrf.mxu0
    %v679 = vpop.f32.mrf.mxu0
    %v680 = vadd.f32 %v512, %v679
    %v681 = vpop.f32.mrf.mxu0
    %682 = vmatprep.mubr.bf16.mxu0 0
    %683 = vmatmul.mubr.bf16.gmra.mxu0 %v486
    %v684 = vpop.f32.mrf.mxu0
    %v685 = vadd.f32 %v512, %v684
    %v686 = vpop.f32.mrf.mxu0
    %v687 = vpop.f32.mrf.mxu0
    %v688 = vadd.f32 %v512, %v687
    %v689 = vpop.f32.mrf.mxu0
    %690 = vmatprep.mubr.bf16.mxu0 0
    %691 = vmatmul.mubr.bf16.gmra.mxu0 %v487
    %v692 = vpop.f32.mrf.mxu0
    %v693 = vadd.f32 %v512, %v692
    %v694 = vpop.f32.mrf.mxu0
    %v695 = vpop.f32.mrf.mxu0
    %v696 = vadd.f32 %v512, %v695
    %v697 = vpop.f32.mrf.mxu0
    %698 = vmatprep.mubr.bf16.mxu0 0
    %699 = vmatmul.mubr.bf16.gmra.mxu0 %v488
    %v700 = vpop.f32.mrf.mxu0
    %v701 = vadd.f32 %v512, %v700
    %v702 = vpop.f32.mrf.mxu0
    %v703 = vpop.f32.mrf.mxu0
    %v704 = vadd.f32 %v512, %v703
    %v705 = vpop.f32.mrf.mxu0
    %706 = vmatprep.mubr.bf16.mxu0 0
    %707 = vmatmul.mubr.bf16.gmra.mxu0 %v489
    %v708 = vpop.f32.mrf.mxu0
    %v709 = vadd.f32 %v512, %v708
    %v710 = vpop.f32.mrf.mxu0
    %v711 = vpop.f32.mrf.mxu0
    %v712 = vadd.f32 %v512, %v711
    %v713 = vpop.f32.mrf.mxu0
    %714 = vmatprep.mubr.bf16.mxu0 0
    %715 = vmatmul.mubr.bf16.gmra.mxu0 %v490
    %v716 = vpop.f32.mrf.mxu0
    %v717 = vadd.f32 %v512, %v716
    %v718 = vpop.f32.mrf.mxu0
    %v719 = vpop.f32.mrf.mxu0
    %v720 = vadd.f32 %v512, %v719
    %v721 = vpop.f32.mrf.mxu0
    %722 = vdwg.mxu0
    %v723 = vmax.f32 %v597, 0.0
    %v724 = vmax.f32 %v600, 0.0
    %v725 = vmax.f32 %v605, 0.0
    %v726 = vmax.f32 %v608, 0.0
    %v727 = vmax.f32 %v613, 0.0
    %v728 = vmax.f32 %v616, 0.0
    %v729 = vmax.f32 %v621, 0.0
    %v730 = vmax.f32 %v624, 0.0
    %v731 = vmax.f32 %v629, 0.0
    %v732 = vmax.f32 %v632, 0.0
    %v733 = vmax.f32 %v637, 0.0
    %v734 = vmax.f32 %v640, 0.0
    %v735 = vmax.f32 %v645, 0.0
    %v736 = vmax.f32 %v648, 0.0
    %v737 = vmax.f32 %v653, 0.0
    %v738 = vmax.f32 %v656, 0.0
    %v739 = vmax.f32 %v661, 0.0
    %v740 = vmax.f32 %v664, 0.0
    %v741 = vmax.f32 %v669, 0.0
    %v742 = vmax.f32 %v672, 0.0
    %v743 = vmax.f32 %v677, 0.0
    %v744 = vmax.f32 %v680, 0.0
    %v745 = vmax.f32 %v685, 0.0
    %v746 = vmax.f32 %v688, 0.0
    %v747 = vmax.f32 %v693, 0.0
    %v748 = vmax.f32 %v696, 0.0
    %v749 = vmax.f32 %v701, 0.0
    %v750 = vmax.f32 %v704, 0.0
    %v751 = vmax.f32 %v709, 0.0
    %v752 = vmax.f32 %v712, 0.0
    %v753 = vmax.f32 %v717, 0.0
    %v754 = vmax.f32 %v720, 0.0
    %v755 = vpack.c.bf16 %v724, %v723
    %v756 = vpack.c.bf16 %v726, %v725
    %v757 = vpack.c.bf16 %v728, %v727
    %v758 = vpack.c.bf16 %v730, %v729
    %v759 = vpack.c.bf16 %v732, %v731
    %v760 = vpack.c.bf16 %v734, %v733
    %v761 = vpack.c.bf16 %v736, %v735
    %v762 = vpack.c.bf16 %v738, %v737
    %v763 = vpack.c.bf16 %v740, %v739
    %v764 = vpack.c.bf16 %v742, %v741
    %v765 = vpack.c.bf16 %v744, %v743
    %v766 = vpack.c.bf16 %v746, %v745
    %v767 = vpack.c.bf16 %v748, %v747
    %v768 = vpack.c.bf16 %v750, %v749
    %v769 = vpack.c.bf16 %v752, %v751
    %v770 = vpack.c.bf16 %v754, %v753
    %v771 = vld [vmem:[#allocation8] sm:$0xf]
    %v772 = vld [vmem:[#allocation8 + $0x4] sm:$0xf]
    %v773 = vld [vmem:[#allocation8 + $0x8] sm:$0xf]
    %v774 = vld [vmem:[#allocation8 + $0xc] sm:$0xf]
    %v775 = vld [vmem:[#allocation8 + $0x10] sm:$0xf]
    %v776 = vld [vmem:[#allocation8 + $0x14] sm:$0xf]
    %v777 = vld [vmem:[#allocation8 + $0x18] sm:$0xf]
    %v778 = vld [vmem:[#allocation8 + $0x1c] sm:$0xf]
    %v779 = vld [vmem:[#allocation8 + $0x20] sm:$0xf]
    %v780 = vld [vmem:[#allocation8 + $0x24] sm:$0xf]
    %v781 = vld [vmem:[#allocation8 + $0x28] sm:$0xf]
    %v782 = vld [vmem:[#allocation8 + $0x2c] sm:$0xf]
    %v783 = vld [vmem:[#allocation8 + $0x30] sm:$0xf]
    %v784 = vld [vmem:[#allocation8 + $0x34] sm:$0xf]
    %v785 = vld [vmem:[#allocation8 + $0x38] sm:$0xf]
    %v786 = vld [vmem:[#allocation8 + $0x3c] sm:$0xf]
    %v787 = vld [vmem:[%s6] sm:$0x1]
    %v789 = vlaneseq
    %v790 = vshrl.u32 %v789, 7
    %v791 = vsub.s32 0, %v790
    %v792 = vrot.slane %v787, %v791
    %v810 = vunpack.c.l.b16 %v771
    %v811 = vunpack.c.l.b16 %v772
    %v812 = vunpack.c.l.b16 %v773
    %v813 = vunpack.c.l.b16 %v774
    %v814 = vunpack.c.l.b16 %v775
    %v815 = vunpack.c.l.b16 %v776
    %v816 = vunpack.c.l.b16 %v777
    %v817 = vunpack.c.l.b16 %v778
    %v818 = vunpack.c.l.b16 %v779
    %v819 = vunpack.c.l.b16 %v780
    %v820 = vunpack.c.l.b16 %v781
    %v821 = vunpack.c.l.b16 %v782
    %v822 = vunpack.c.l.b16 %v783
    %v823 = vunpack.c.l.b16 %v784
    %v824 = vunpack.c.l.b16 %v785
    %v825 = vunpack.c.l.b16 %v786
    %v826 = vpack.c.b16 %v811, %v810
    %v827 = vpack.c.b16 %v813, %v812
    %v828 = vpack.c.b16 %v815, %v814
    %v829 = vpack.c.b16 %v817, %v816
    %v830 = vpack.c.b16 %v819, %v818
    %v831 = vpack.c.b16 %v821, %v820
    %v832 = vpack.c.b16 %v823, %v822
    %v833 = vpack.c.b16 %v825, %v824
    %842 = vmatprep.subr.bf16.mxu0 0
    %843 = vmatpush1.bf16.msra.mxu0 %v833
    %844 = vmatprep.subr.bf16.mxu0 0
    %845 = vmatpush1.bf16.msra.mxu0 %v832
    %846 = vmatprep.subr.bf16.mxu0 0
    %847 = vmatpush1.bf16.msra.mxu0 %v831
    %848 = vmatprep.subr.bf16.mxu0 0
    %849 = vmatpush1.bf16.msra.mxu0 %v830
    %850 = vmatprep.subr.bf16.mxu0 0
    %851 = vmatpush1.bf16.msra.mxu0 %v829
    %852 = vmatprep.subr.bf16.mxu0 0
    %853 = vmatpush1.bf16.msra.mxu0 %v828
    %854 = vmatprep.subr.bf16.mxu0 0
    %855 = vmatpush1.bf16.msra.mxu0 %v827
    %856 = vmatprep.subr.bf16.mxu0 0
    %857 = vmatpush1.bf16.msra.mxu0 %v826
    %858 = vmatprep.subr.bf16.mxu0 0
    %859 = vmatpush2.bf16.msra.mxu0 0
    %860 = vmatprep.subr.bf16.mxu0 0
    %861 = vmatpush2.bf16.msra.mxu0 0
    %862 = vmatprep.subr.bf16.mxu0 0
    %863 = vmatpush2.bf16.msra.mxu0 0
    %864 = vmatprep.subr.bf16.mxu0 0
    %865 = vmatpush2.bf16.msra.mxu0 0
    %866 = vmatprep.subr.bf16.mxu0 0
    %867 = vmatpush2.bf16.msra.mxu0 0
    %868 = vmatprep.subr.bf16.mxu0 0
    %869 = vmatpush2.bf16.msra.mxu0 0
    %870 = vmatprep.subr.bf16.mxu0 0
    %871 = vmatpush2.bf16.msra.mxu0 0
    %872 = vmatprep.subr.bf16.mxu0 0
    %873 = vmatpush2.bf16.msra.mxu0 0
    %874 = vmatprep.mubr.bf16.mxu0 0
    %875 = vmatmul.mubr.bf16.gmra.mxu0 %v755
    %v876 = vpop.f32.mrf.mxu0
    %v877 = vadd.f32 %v792, %v876
    %v878 = vpop.f32.mrf.mxu0
    %v879 = vpop.f32.mrf.mxu0
    %v880 = vadd.f32 %v792, %v879
    %v881 = vpop.f32.mrf.mxu0
    %882 = vmatprep.mubr.bf16.mxu0 0
    %883 = vmatmul.mubr.bf16.gmra.mxu0 %v756
    %v884 = vpop.f32.mrf.mxu0
    %v885 = vadd.f32 %v792, %v884
    %v886 = vpop.f32.mrf.mxu0
    %v887 = vpop.f32.mrf.mxu0
    %v888 = vadd.f32 %v792, %v887
    %v889 = vpop.f32.mrf.mxu0
    %890 = vmatprep.mubr.bf16.mxu0 0
    %891 = vmatmul.mubr.bf16.gmra.mxu0 %v757
    %v892 = vpop.f32.mrf.mxu0
    %v893 = vadd.f32 %v792, %v892
    %v894 = vpop.f32.mrf.mxu0
    %v895 = vpop.f32.mrf.mxu0
    %v896 = vadd.f32 %v792, %v895
    %v897 = vpop.f32.mrf.mxu0
    %898 = vmatprep.mubr.bf16.mxu0 0
    %899 = vmatmul.mubr.bf16.gmra.mxu0 %v758
    %v900 = vpop.f32.mrf.mxu0
    %v901 = vadd.f32 %v792, %v900
    %v902 = vpop.f32.mrf.mxu0
    %v903 = vpop.f32.mrf.mxu0
    %v904 = vadd.f32 %v792, %v903
    %v905 = vpop.f32.mrf.mxu0
    %906 = vmatprep.mubr.bf16.mxu0 0
    %907 = vmatmul.mubr.bf16.gmra.mxu0 %v759
    %v908 = vpop.f32.mrf.mxu0
    %v909 = vadd.f32 %v792, %v908
    %v910 = vpop.f32.mrf.mxu0
    %v911 = vpop.f32.mrf.mxu0
    %v912 = vadd.f32 %v792, %v911
    %v913 = vpop.f32.mrf.mxu0
    %914 = vmatprep.mubr.bf16.mxu0 0
    %915 = vmatmul.mubr.bf16.gmra.mxu0 %v760
    %v916 = vpop.f32.mrf.mxu0
    %v917 = vadd.f32 %v792, %v916
    %v918 = vpop.f32.mrf.mxu0
    %v919 = vpop.f32.mrf.mxu0
    %v920 = vadd.f32 %v792, %v919
    %v921 = vpop.f32.mrf.mxu0
    %922 = vmatprep.mubr.bf16.mxu0 0
    %923 = vmatmul.mubr.bf16.gmra.mxu0 %v761
    %v924 = vpop.f32.mrf.mxu0
    %v925 = vadd.f32 %v792, %v924
    %v926 = vpop.f32.mrf.mxu0
    %v927 = vpop.f32.mrf.mxu0
    %v928 = vadd.f32 %v792, %v927
    %v929 = vpop.f32.mrf.mxu0
    %930 = vmatprep.mubr.bf16.mxu0 0
    %931 = vmatmul.mubr.bf16.gmra.mxu0 %v762
    %v932 = vpop.f32.mrf.mxu0
    %v933 = vadd.f32 %v792, %v932
    %v934 = vpop.f32.mrf.mxu0
    %v935 = vpop.f32.mrf.mxu0
    %v936 = vadd.f32 %v792, %v935
    %v937 = vpop.f32.mrf.mxu0
    %938 = vmatprep.mubr.bf16.mxu0 0
    %939 = vmatmul.mubr.bf16.gmra.mxu0 %v763
    %v940 = vpop.f32.mrf.mxu0
    %v941 = vadd.f32 %v792, %v940
    %v942 = vpop.f32.mrf.mxu0
    %v943 = vpop.f32.mrf.mxu0
    %v944 = vadd.f32 %v792, %v943
    %v945 = vpop.f32.mrf.mxu0
    %946 = vmatprep.mubr.bf16.mxu0 0
    %947 = vmatmul.mubr.bf16.gmra.mxu0 %v764
    %v948 = vpop.f32.mrf.mxu0
    %v949 = vadd.f32 %v792, %v948
    %v950 = vpop.f32.mrf.mxu0
    %v951 = vpop.f32.mrf.mxu0
    %v952 = vadd.f32 %v792, %v951
    %v953 = vpop.f32.mrf.mxu0
    %954 = vmatprep.mubr.bf16.mxu0 0
    %955 = vmatmul.mubr.bf16.gmra.mxu0 %v765
    %v956 = vpop.f32.mrf.mxu0
    %v957 = vadd.f32 %v792, %v956
    %v958 = vpop.f32.mrf.mxu0
    %v959 = vpop.f32.mrf.mxu0
    %v960 = vadd.f32 %v792, %v959
    %v961 = vpop.f32.mrf.mxu0
    %962 = vmatprep.mubr.bf16.mxu0 0
    %963 = vmatmul.mubr.bf16.gmra.mxu0 %v766
    %v964 = vpop.f32.mrf.mxu0
    %v965 = vadd.f32 %v792, %v964
    %v966 = vpop.f32.mrf.mxu0
    %v967 = vpop.f32.mrf.mxu0
    %v968 = vadd.f32 %v792, %v967
    %v969 = vpop.f32.mrf.mxu0
    %970 = vmatprep.mubr.bf16.mxu0 0
    %971 = vmatmul.mubr.bf16.gmra.mxu0 %v767
    %v972 = vpop.f32.mrf.mxu0
    %v973 = vadd.f32 %v792, %v972
    %v974 = vpop.f32.mrf.mxu0
    %v975 = vpop.f32.mrf.mxu0
    %v976 = vadd.f32 %v792, %v975
    %v977 = vpop.f32.mrf.mxu0
    %978 = vmatprep.mubr.bf16.mxu0 0
    %979 = vmatmul.mubr.bf16.gmra.mxu0 %v768
    %v980 = vpop.f32.mrf.mxu0
    %v981 = vadd.f32 %v792, %v980
    %v982 = vpop.f32.mrf.mxu0
    %v983 = vpop.f32.mrf.mxu0
    %v984 = vadd.f32 %v792, %v983
    %v985 = vpop.f32.mrf.mxu0
    %986 = vmatprep.mubr.bf16.mxu0 0
    %987 = vmatmul.mubr.bf16.gmra.mxu0 %v769
    %v988 = vpop.f32.mrf.mxu0
    %v989 = vadd.f32 %v792, %v988
    %v990 = vpop.f32.mrf.mxu0
    %v991 = vpop.f32.mrf.mxu0
    %v992 = vadd.f32 %v792, %v991
    %v993 = vpop.f32.mrf.mxu0
    %994 = vmatprep.mubr.bf16.mxu0 0
    %995 = vmatmul.mubr.bf16.gmra.mxu0 %v770
    %v996 = vpop.f32.mrf.mxu0
    %v997 = vadd.f32 %v792, %v996
    %v998 = vpop.f32.mrf.mxu0
    %v999 = vpop.f32.mrf.mxu0
    %v1000 = vadd.f32 %v792, %v999
    %v1001 = vpop.f32.mrf.mxu0
    %1002 = vdwg.mxu0
    %1003 = vst [vmem:[#allocation10] sm:$0xff] %v877
    %1004 = vst [vmem:[#allocation10 + $0x8] sm:$0xff] %v880
    %1005 = vst [vmem:[#allocation10 + $0x10] sm:$0xff] %v885
    %1006 = vst [vmem:[#allocation10 + $0x18] sm:$0xff] %v888
    %1007 = vst [vmem:[#allocation10 + $0x20] sm:$0xff] %v893
    %1008 = vst [vmem:[#allocation10 + $0x28] sm:$0xff] %v896
    %1009 = vst [vmem:[#allocation10 + $0x30] sm:$0xff] %v901
    %1010 = vst [vmem:[#allocation10 + $0x38] sm:$0xff] %v904
    %1011 = vst [vmem:[#allocation10 + $0x40] sm:$0xff] %v909
    %1012 = vst [vmem:[#allocation10 + $0x48] sm:$0xff] %v912
    %1013 = vst [vmem:[#allocation10 + $0x50] sm:$0xff] %v917
    %1014 = vst [vmem:[#allocation10 + $0x58] sm:$0xff] %v920
    %1015 = vst [vmem:[#allocation10 + $0x60] sm:$0xff] %v925
    %1016 = vst [vmem:[#allocation10 + $0x68] sm:$0xff] %v928
    %1017 = vst [vmem:[#allocation10 + $0x70] sm:$0xff] %v933
    %1018 = vst [vmem:[#allocation10 + $0x78] sm:$0xff] %v936
    %1019 = vst [vmem:[#allocation10 + $0x80] sm:$0xff] %v941
    %1020 = vst [vmem:[#allocation10 + $0x88] sm:$0xff] %v944
    %1021 = vst [vmem:[#allocation10 + $0x90] sm:$0xff] %v949
    %1022 = vst [vmem:[#allocation10 + $0x98] sm:$0xff] %v952
    %1023 = vst [vmem:[#allocation10 + $0xa0] sm:$0xff] %v957
    %1024 = vst [vmem:[#allocation10 + $0xa8] sm:$0xff] %v960
    %1025 = vst [vmem:[#allocation10 + $0xb0] sm:$0xff] %v965
    %1026 = vst [vmem:[#allocation10 + $0xb8] sm:$0xff] %v968
    %1027 = vst [vmem:[#allocation10 + $0xc0] sm:$0xff] %v973
    %1028 = vst [vmem:[#allocation10 + $0xc8] sm:$0xff] %v976
    %1029 = vst [vmem:[#allocation10 + $0xd0] sm:$0xff] %v981
    %1030 = vst [vmem:[#allocation10 + $0xd8] sm:$0xff] %v984
    %1031 = vst [vmem:[#allocation10 + $0xe0] sm:$0xff] %v989
    %1032 = vst [vmem:[#allocation10 + $0xe8] sm:$0xff] %v992
    %1033 = vst [vmem:[#allocation10 + $0xf0] sm:$0xff] %v997
    %1034 = vst [vmem:[#allocation10 + $0xf8] sm:$0xff] %v1000
    // Predicated region
    $region46: #{tpu_custom_call.1} parent=1 // pred_check
      _
    $region47: #{tpu_custom_call.1} parent=1 // pred_check_branch
      %1036 = sbr.rel (0) target = $region49
    $region48: #{tpu_custom_call.1} parent=1 // pred_region
      %s1038 = ssub.s32 4096, 4096
      %1039 = vsyncadd [#allocation4], %s1038
      %s1040 = sshll.u32 [#allocation10], 4
      %s1041 = int_to_ptr.vmem [resolvable:$true] %s1040
      %1046 = dma.vmem_to_hbm [thread:$0]  %s1041, 4096, %s7, [#allocation4], 128, 128, 8
    $region49: #{tpu_custom_call.1} parent=1 // pred_fallthru
      _
    // Predicated region
    $region50: #{tpu_custom_call.1} parent=1 // pred_check
      _
    $region51: #{tpu_custom_call.1} parent=1 // pred_check_branch
      %1048 = sbr.rel (0) target = $region53
    $region52: #{tpu_custom_call.1} parent=1 // pred_region
      %1049 = dma.done [#allocation4], 4096
    $region53: #{tpu_custom_call.1} parent=1 // pred_fallthru
      _
    %1050 = vsyncpa [#allocation3], 1
    %1051 = vsyncpa [#allocation6], 1
    %1052 = vsyncpa [#allocation9], 1
    %1053 = vsyncpa [#allocation4], 1

</llo_original>
